<compile_context>
chip_gen: v7x
topology: tpu7x:2x2x1
jax: 0.10.0
libtpu: 0.0.40
codegen_flags: <defaults>
</compile_context>

<pallas_src>
import jax
import jax.numpy as jnp
from jax import lax
from jax.experimental import pallas as pl
from jax.experimental.pallas import tpu as pltpu

_LANE = 128
_SUBLANE = 8


def _detector_kernel(
    x_ref,
    w1_ref, b1_ref,
    w2_ref, b2_ref,
    w3_ref, b3_ref,
    w4t_ref, b4_ref,
    o_ref,
):
    cd = w1_ref.dtype

    # ---- Layer 1: Linear(851->128) + ReLU (BN1 folded into W2/b2) ----
    # Cast f32 -> bf16 in-kernel (VPU work hidden under the x DMA); K=851 is an
    # unaligned contraction - Mosaic masks the padded lanes.
    h = jnp.dot(x_ref[...].astype(cd), w1_ref[...],
                preferred_element_type=jnp.float32)
    h = jnp.maximum(h + b1_ref[...], 0.0).astype(cd)

    # ---- Layer 2: Linear(128->64) + ReLU (BN2 folded into W3/b3) ----
    h = jnp.dot(h, w2_ref[...], preferred_element_type=jnp.float32)
    h = jnp.maximum(h + b2_ref[...], 0.0).astype(cd)

    # ---- Layer 3: Linear(64->32) + ReLU (BN3 folded into W4/b4) ----
    h = jnp.dot(h, w3_ref[...], preferred_element_type=jnp.float32)
    h = jnp.maximum(h + b3_ref[...], 0.0)          # keep f32 for the tiny head

    # ---- Head: Linear(32->1) + Sigmoid, computed transposed -> (1, tb) ----
    # logits_t[0, t] = sum_k w4t[0, k] * h[t, k]   (contract rhs minor dim)
    logits_t = lax.dot_general(
        w4t_ref[...], h, (((1,), (1,)), ((), ())),
        preferred_element_type=jnp.float32)        # (1, tb) lane-dense
    probs = jax.nn.sigmoid(logits_t + b4_ref[...])
    o_ref[...] = probs.reshape(o_ref.shape)        # (1, tb) -> (1, 1, tb): free


def deepfake_detector_forward(x, params, *, tb=4096, compute_dtype=jnp.bfloat16):
    """x: [B, input_features] float32 -> [B, 1] float32 probabilities (eval mode)."""
    B, F = x.shape

    (w1, b1, g1, be1, m1, v1,
     w2, b2, g2, be2, m2, v2,
     w3, b3, g3, be3, m3, v3,
     w4, b4) = params

    eps = jnp.float32(1e-5)

    def fold_bn(gamma, beta, mean, var):
        scale = gamma / jnp.sqrt(var + eps)
        shift = beta - mean * scale
        return scale, shift

    s1, t1 = fold_bn(g1, be1, m1, v1)
    s2, t2 = fold_bn(g2, be2, m2, v2)
    s3, t3 = fold_bn(g3, be3, m3, v3)

    # PyTorch Linear weights are [out, in]; pre-transpose to [in, out] and fold the
    # preceding BN affine into the next layer's weights (exact: fold is after ReLU).
    wt1 = w1.T                                  # [F, 128]
    wt2 = s1[:, None] * w2.T                    # [128, 64]
    bb2 = t1 @ w2.T + b2
    wt3 = s2[:, None] * w3.T                    # [64, 32]
    bb3 = t2 @ w3.T + b3
    w4t = w4 * s3[None, :]                      # [1, 32]  (head kept in f32)
    bb4 = (w4 @ t3 + b4).reshape(1, 1)

    H1, H2, H3 = wt1.shape[1], wt2.shape[1], wt3.shape[1]
    cd = compute_dtype

    # Batch tile: clamp to B; ensure >=2 grid steps (multiple of 8 when tiling) so
    # the "parallel" batch axis actually uses both TensorCores on v7x.
    tb = max(1, min(tb, B))
    if B > _SUBLANE:
        half = ((pl.cdiv(B, 2) + _SUBLANE - 1) // _SUBLANE) * _SUBLANE
        tb = min(tb, half)
        tb = max(_SUBLANE, (tb // _SUBLANE) * _SUBLANE)
    grid_b = pl.cdiv(B, tb)

    args = (
        x,                                       # unpadded f32; cast in-kernel
        wt1.astype(cd), b1.reshape(1, H1).astype(jnp.float32),
        wt2.astype(cd), bb2.reshape(1, H2).astype(jnp.float32),
        wt3.astype(cd), bb3.reshape(1, H3).astype(jnp.float32),
        w4t.astype(jnp.float32), bb4.astype(jnp.float32),
    )

    const = lambda i: (0, 0)   # weights/biases: same block every step -> VMEM-resident
    in_specs = [
        pl.BlockSpec((tb, F), lambda i: (i, 0)),
        pl.BlockSpec((F, H1), const), pl.BlockSpec((1, H1), const),
        pl.BlockSpec((H1, H2), const), pl.BlockSpec((1, H2), const),
        pl.BlockSpec((H2, H3), const), pl.BlockSpec((1, H3), const),
        pl.BlockSpec((1, H3), const), pl.BlockSpec((1, 1), const),
    ]
    # Lane-dense output slab: one (1, tb) row per grid step.
    out_specs = pl.BlockSpec((1, 1, tb), lambda i: (i, 0, 0))

    out = pl.pallas_call(
        _detector_kernel,
        out_shape=jax.ShapeDtypeStruct((grid_b, 1, tb), jnp.float32),
        grid=(grid_b,),
        in_specs=in_specs,
        out_specs=out_specs,
        compiler_params=pltpu.CompilerParams(
            # Batch rows are independent -> shard across TensorCores on v7x.
            dimension_semantics=("parallel",),
            # TB=4096 f32 x double-buffers (~28 MiB) + in-kernel bf16 copy and
            # intermediates fit under 48 MiB; safe on every generation.
            vmem_limit_bytes=48 * 1024 * 1024,
        ),
    )(*args)

    # (G, 1, tb) -> (G*tb, 1) is a contiguous (free) reshape; drop padded tail rows.
    return out.reshape(grid_b * tb, 1)[:B]


def init_params(key, input_features=851, hidden_dim=128):
    """Deterministic synthetic parameters matching the PyTorch module shapes."""
    dims = [
        (hidden_dim, input_features),
        (hidden_dim // 2, hidden_dim),
        (hidden_dim // 4, hidden_dim // 2),
        (1, hidden_dim // 4),
    ]
    params = []
    keys = jax.random.split(key, 16)
    ki = 0
    for li, (dout, din) in enumerate(dims):
        w = jax.random.normal(keys[ki], (dout, din), jnp.float32) * 0.05
        ki += 1
        b = jax.random.normal(keys[ki], (dout,), jnp.float32) * 0.05
        ki += 1
        params.extend([w, b])
        if li < 3:  # BatchNorm1d after the first three Linear layers
            gamma = 1.0 + 0.1 * jax.random.normal(keys[ki], (dout,), jnp.float32)
            ki += 1
            beta = 0.1 * jax.random.normal(keys[ki], (dout,), jnp.float32)
            ki += 1
            running_mean = jnp.zeros((dout,), jnp.float32)
            running_var = jnp.ones((dout,), jnp.float32)
            params.extend([gamma, beta, running_mean, running_var])
    return tuple(params)


def reference_forward(x, params):
    """Pure-JAX f32 reference of the same eval-mode forward."""
    (w1, b1, g1, be1, m1, v1,
     w2, b2, g2, be2, m2, v2,
     w3, b3, g3, be3, m3, v3,
     w4, b4) = params
    eps = 1e-5

    def block(h, w, b, g, be, m, v):
        h = h @ w.T + b
        h = jnp.maximum(h, 0.0)
        return g * (h - m) / jnp.sqrt(v + eps) + be

    h = block(x, w1, b1, g1, be1, m1, v1)
    h = block(h, w2, b2, g2, be2, m2, v2)
    h = block(h, w3, b3, g3, be3, m3, v3)
    return jax.nn.sigmoid(h @ w4.T + b4)


if __name__ == "__main__":
    key = jax.random.PRNGKey(0)
    k_x, k_p = jax.random.split(key)

    batch = 64
    input_features = 851
    hidden_dim = 128

    x = jax.random.normal(k_x, (batch, input_features), jnp.float32)
    params = init_params(k_p, input_features, hidden_dim)

    # Default tb gets clamped to ceil(B/2)=32 here, exercising a 2-step grid
    # (the v7x dual-TensorCore path) and the lane-dense output slab.
    out = deepfake_detector_forward(x, params)
    out = jax.block_until_ready(out)

    ref = reference_forward(x, params)
    assert out.shape == (batch, 1)
    max_err = float(jnp.max(jnp.abs(out - ref)))
    # bf16 weights / in-kernel bf16 x with f32 accumulation vs f32 reference.
    assert max_err < 2e-2, f"max abs diff {max_err}"
    print("KERNEL_OK")
</pallas_src>

<mosaic_0001>
module attributes {stable_mosaic.version = 11 : i64} {
  func.func @_detector_kernel(%arg0: i32, %arg1: memref<32x851xf32, #tpu.memory_space<vmem>>, %arg2: memref<851x128xbf16, #tpu.memory_space<vmem>>, %arg3: memref<1x128xf32, #tpu.memory_space<vmem>>, %arg4: memref<128x64xbf16, #tpu.memory_space<vmem>>, %arg5: memref<1x64xf32, #tpu.memory_space<vmem>>, %arg6: memref<64x32xbf16, #tpu.memory_space<vmem>>, %arg7: memref<1x32xf32, #tpu.memory_space<vmem>>, %arg8: memref<1x32xf32, #tpu.memory_space<vmem>>, %arg9: memref<1x1xf32, #tpu.memory_space<vmem>>, %arg10: memref<1x1x32xf32, #tpu.memory_space<vmem>>) attributes {dimension_semantics = [#tpu.dimension_semantics<parallel>], iteration_bounds = array<i64: 2>, scalar_prefetch = 0 : i64, scratch_operands = 0 : i64, tpu.core_type = #tpu.core_type<tc>, window_params = [{transform_indices = @transform_0, window_bounds = array<i64: 32, 851>}, {pipeline_mode = #tpu.pipeline_mode<synchronous>, transform_indices = @transform_1, window_bounds = array<i64: 851, 128>}, {pipeline_mode = #tpu.pipeline_mode<synchronous>, transform_indices = @transform_2, window_bounds = array<i64: 1, 128>}, {pipeline_mode = #tpu.pipeline_mode<synchronous>, transform_indices = @transform_3, window_bounds = array<i64: 128, 64>}, {pipeline_mode = #tpu.pipeline_mode<synchronous>, transform_indices = @transform_4, window_bounds = array<i64: 1, 64>}, {pipeline_mode = #tpu.pipeline_mode<synchronous>, transform_indices = @transform_5, window_bounds = array<i64: 64, 32>}, {pipeline_mode = #tpu.pipeline_mode<synchronous>, transform_indices = @transform_6, window_bounds = array<i64: 1, 32>}, {pipeline_mode = #tpu.pipeline_mode<synchronous>, transform_indices = @transform_7, window_bounds = array<i64: 1, 32>}, {pipeline_mode = #tpu.pipeline_mode<synchronous>, transform_indices = @transform_8, window_bounds = array<i64: 1, 1>}, {transform_indices = @transform_9, window_bounds = array<i64: 1, 1, 32>}]} {
    %c0 = arith.constant 0 : index
    %c0_0 = arith.constant 0 : index
    %0 = vector.load %arg1[%c0, %c0_0] : memref<32x851xf32, #tpu.memory_space<vmem>>, vector<32x851xf32>
    %1 = arith.truncf %0 : vector<32x851xf32> to vector<32x851xbf16>
    %c0_1 = arith.constant 0 : index
    %c0_2 = arith.constant 0 : index
    %2 = vector.load %arg2[%c0_1, %c0_2] : memref<851x128xbf16, #tpu.memory_space<vmem>>, vector<851x128xbf16>
    %cst = arith.constant dense<0.000000e+00> : vector<32x128xf32>
    %3 = tpu.matmul %1, %2, %cst {dimension_numbers = #tpu.dot_dimension_numbers<[1], [0], [0], [1], [0, 0, 1, 1], [], []>} : vector<32x851xbf16>, vector<851x128xbf16>, vector<32x128xf32> -> vector<32x128xf32>
    %c0_3 = arith.constant 0 : index
    %c0_4 = arith.constant 0 : index
    %4 = vector.load %arg3[%c0_3, %c0_4] : memref<1x128xf32, #tpu.memory_space<vmem>>, vector<1x128xf32>
    %5 = vector.broadcast %4 : vector<1x128xf32> to vector<32x128xf32>
    %6 = arith.addf %3, %5 : vector<32x128xf32>
    %cst_5 = arith.constant 0.000000e+00 : f32
    %7 = vector.broadcast %cst_5 : f32 to vector<32x128xf32>
    %8 = arith.maximumf %6, %7 : vector<32x128xf32>
    %9 = arith.truncf %8 : vector<32x128xf32> to vector<32x128xbf16>
    %c0_6 = arith.constant 0 : index
    %c0_7 = arith.constant 0 : index
    %10 = vector.load %arg4[%c0_6, %c0_7] : memref<128x64xbf16, #tpu.memory_space<vmem>>, vector<128x64xbf16>
    %cst_8 = arith.constant dense<0.000000e+00> : vector<32x64xf32>
    %11 = tpu.matmul %9, %10, %cst_8 {dimension_numbers = #tpu.dot_dimension_numbers<[1], [0], [0], [1], [0, 0, 1, 1], [], []>} : vector<32x128xbf16>, vector<128x64xbf16>, vector<32x64xf32> -> vector<32x64xf32>
    %c0_9 = arith.constant 0 : index
    %c0_10 = arith.constant 0 : index
    %12 = vector.load %arg5[%c0_9, %c0_10] : memref<1x64xf32, #tpu.memory_space<vmem>>, vector<1x64xf32>
    %13 = vector.broadcast %12 : vector<1x64xf32> to vector<32x64xf32>
    %14 = arith.addf %11, %13 : vector<32x64xf32>
    %cst_11 = arith.constant 0.000000e+00 : f32
    %15 = vector.broadcast %cst_11 : f32 to vector<32x64xf32>
    %16 = arith.maximumf %14, %15 : vector<32x64xf32>
    %17 = arith.truncf %16 : vector<32x64xf32> to vector<32x64xbf16>
    %c0_12 = arith.constant 0 : index
    %c0_13 = arith.constant 0 : index
    %18 = vector.load %arg6[%c0_12, %c0_13] : memref<64x32xbf16, #tpu.memory_space<vmem>>, vector<64x32xbf16>
    %cst_14 = arith.constant dense<0.000000e+00> : vector<32x32xf32>
    %19 = tpu.matmul %17, %18, %cst_14 {dimension_numbers = #tpu.dot_dimension_numbers<[1], [0], [0], [1], [0, 0, 1, 1], [], []>} : vector<32x64xbf16>, vector<64x32xbf16>, vector<32x32xf32> -> vector<32x32xf32>
    %c0_15 = arith.constant 0 : index
    %c0_16 = arith.constant 0 : index
    %20 = vector.load %arg7[%c0_15, %c0_16] : memref<1x32xf32, #tpu.memory_space<vmem>>, vector<1x32xf32>
    %21 = vector.broadcast %20 : vector<1x32xf32> to vector<32x32xf32>
    %22 = arith.addf %19, %21 : vector<32x32xf32>
    %cst_17 = arith.constant 0.000000e+00 : f32
    %23 = vector.broadcast %cst_17 : f32 to vector<32x32xf32>
    %24 = arith.maximumf %22, %23 : vector<32x32xf32>
    %c0_18 = arith.constant 0 : index
    %c0_19 = arith.constant 0 : index
    %25 = vector.load %arg8[%c0_18, %c0_19] : memref<1x32xf32, #tpu.memory_space<vmem>>, vector<1x32xf32>
    %cst_20 = arith.constant dense<0.000000e+00> : vector<1x32xf32>
    %26 = tpu.matmul %25, %24, %cst_20 {dimension_numbers = #tpu.dot_dimension_numbers<[1], [1], [0], [0], [0, 0, 1, 0], [], []>} : vector<1x32xf32>, vector<32x32xf32>, vector<1x32xf32> -> vector<1x32xf32>
    %c0_21 = arith.constant 0 : index
    %c0_22 = arith.constant 0 : index
    %27 = vector.load %arg9[%c0_21, %c0_22] : memref<1x1xf32, #tpu.memory_space<vmem>>, vector<1x1xf32>
    %28 = vector.broadcast %27 : vector<1x1xf32> to vector<1x32xf32>
    %29 = arith.addf %26, %28 : vector<1x32xf32>
    %30 = arith.negf %29 : vector<1x32xf32>
    %31 = math.exp %30 : vector<1x32xf32>
    %cst_23 = arith.constant 1.000000e+00 : f32
    %32 = vector.broadcast %cst_23 : f32 to vector<1x32xf32>
    %33 = arith.addf %32, %31 : vector<1x32xf32>
    %34 = arith.divf %32, %33 : vector<1x32xf32>
    %35 = vector.shape_cast %34 : vector<1x32xf32> to vector<1x1x32xf32>
    %c0_24 = arith.constant 0 : index
    %c0_25 = arith.constant 0 : index
    %c0_26 = arith.constant 0 : index
    %36 = vector.load %arg10[%c0_24, %c0_25, %c0_26] : memref<1x1x32xf32, #tpu.memory_space<vmem>>, vector<1x1x32xf32>
    tpu.vector_store %arg10[%c0_24, %c0_25, %c0_26], %35 {strides = array<i32>} : memref<1x1x32xf32, #tpu.memory_space<vmem>>, vector<1x1x32xf32>,
    return
  }
  func.func @transform_0(%arg0: i32) -> (i32, i32) {
    %c0_i32 = arith.constant 0 : i32
    %c0_i32_0 = arith.constant 0 : i32
    return %arg0, %c0_i32 : i32, i32
  }
  func.func @transform_1(%arg0: i32) -> (i32, i32) {
    %c0_i32 = arith.constant 0 : i32
    %c0_i32_0 = arith.constant 0 : i32
    %c0_i32_1 = arith.constant 0 : i32
    return %c0_i32, %c0_i32_0 : i32, i32
  }
  func.func @transform_2(%arg0: i32) -> (i32, i32) {
    %c0_i32 = arith.constant 0 : i32
    %c0_i32_0 = arith.constant 0 : i32
    %c0_i32_1 = arith.constant 0 : i32
    return %c0_i32, %c0_i32_0 : i32, i32
  }
  func.func @transform_3(%arg0: i32) -> (i32, i32) {
    %c0_i32 = arith.constant 0 : i32
    %c0_i32_0 = arith.constant 0 : i32
    %c0_i32_1 = arith.constant 0 : i32
    return %c0_i32, %c0_i32_0 : i32, i32
  }
  func.func @transform_4(%arg0: i32) -> (i32, i32) {
    %c0_i32 = arith.constant 0 : i32
    %c0_i32_0 = arith.constant 0 : i32
    %c0_i32_1 = arith.constant 0 : i32
    return %c0_i32, %c0_i32_0 : i32, i32
  }
  func.func @transform_5(%arg0: i32) -> (i32, i32) {
    %c0_i32 = arith.constant 0 : i32
    %c0_i32_0 = arith.constant 0 : i32
    %c0_i32_1 = arith.constant 0 : i32
    return %c0_i32, %c0_i32_0 : i32, i32
  }
  func.func @transform_6(%arg0: i32) -> (i32, i32) {
    %c0_i32 = arith.constant 0 : i32
    %c0_i32_0 = arith.constant 0 : i32
    %c0_i32_1 = arith.constant 0 : i32
    return %c0_i32, %c0_i32_0 : i32, i32
  }
  func.func @transform_7(%arg0: i32) -> (i32, i32) {
    %c0_i32 = arith.constant 0 : i32
    %c0_i32_0 = arith.constant 0 : i32
    %c0_i32_1 = arith.constant 0 : i32
    return %c0_i32, %c0_i32_0 : i32, i32
  }
  func.func @transform_8(%arg0: i32) -> (i32, i32) {
    %c0_i32 = arith.constant 0 : i32
    %c0_i32_0 = arith.constant 0 : i32
    %c0_i32_1 = arith.constant 0 : i32
    return %c0_i32, %c0_i32_0 : i32, i32
  }
  func.func @transform_9(%arg0: i32) -> (i32, i32, i32) {
    %c0_i32 = arith.constant 0 : i32
    %c0_i32_0 = arith.constant 0 : i32
    %c0_i32_1 = arith.constant 0 : i32
    return %arg0, %c0_i32, %c0_i32_0 : i32, i32, i32
  }
}

</mosaic_0001>

<llo_original>
// kernel: tpu_custom_call.1
$region0: #{tpu_custom_call.1}
  #allocation0 [shape = 'u32[]', space=smem, size = 0x4, offset = 0x4, fixed_abs, tag = 'smem constant byte address 0x4 - core index']
  #allocation1 [shape = 'u32[144,128]{1,0:T(1,128)}', space=vmem, size = 0x12000, scoped, tag = 'internal scratch']
  #allocation2 [shape = 'f32[1,1]{1,0:T(1,128)S(1)}', space=vmem, size = 0x200, scoped, tag = 'scoped memory for tpu_custom_call.1']
  %s0 = inlined_call_operand.hbm [shape: f32[64,851], index: 0, kind: input, shape index: {}]
  %s1 = inlined_call_operand.hbm [shape: bf16[851,128], index: 1, kind: input, shape index: {}]
  %s2 = inlined_call_operand.vmem [shape: f32[1,128], index: 2, kind: input, shape index: {}]
  %s3 = inlined_call_operand.vmem [shape: bf16[128,64], index: 3, kind: input, shape index: {}]
  %s4 = inlined_call_operand.vmem [shape: f32[1,64], index: 4, kind: input, shape index: {}]
  %s5 = inlined_call_operand.vmem [shape: bf16[64,32], index: 5, kind: input, shape index: {}]
  %s6 = inlined_call_operand.vmem [shape: f32[1,32], index: 6, kind: input, shape index: {}]
  %s7 = inlined_call_operand.vmem [shape: f32[1,32], index: 7, kind: input, shape index: {}]
  %s8 = inlined_call_operand.<no memory space> [shape: f32[1,1], index: 8, kind: input, shape index: {}]
  %s9 = inlined_call_operand.hbm [shape: f32[2,1,32], index: 9, kind: output, shape index: {}]
  %s10 = sld [smem:[#allocation0]]
  $region77: #{tpu_custom_call.1} parent=0
    _
  %s12 = ssub.s32 1, %s10
  %s13 = scalar_select 0, %s12, %s10
  %v14 = vstv %s8
  %15 = vst [vmem:[#allocation2] sm:$0x1] %v14
  $region1: #{tpu_custom_call.1} parent=0
    #allocation3 [shape = 'u8[229376]{0}', space=vmem, size = 0x38000, scoped, tag = 'input window, operand 0']
    #allocation4 [shape = 's32[2]{0}', space=sflag, size = 0x8, scoped, tag = 'scoped memory for tpu_custom_call.1']
    #allocation5 [shape = 's32[2]{0}', space=sflag, size = 0x8, scoped, tag = 'scoped memory for tpu_custom_call.1']
    #allocation6 [shape = 'u8[219136]{0}', space=vmem, size = 0x35800, scoped, tag = 'input window, operand 1, single buffered']
    #allocation7 [shape = 's32[1]{0}', space=sflag, size = 0x4, scoped, tag = 'scoped memory for tpu_custom_call.1']
    #allocation8 [shape = 'u8[1024]{0}', space=vmem, size = 0x400, scoped, tag = 'output window, operand 0']
    %16 = vsyncpa [#allocation4], 0
    %s17 = scalar_lea.sflag [#allocation4], 1
    %18 = vsyncpa %s17, 0
    %19 = vsyncpa [#allocation7], 0
    %20 = vsyncpa [#allocation5], 0
    %s21 = scalar_lea.sflag [#allocation5], 1
    %22 = vsyncpa %s21, 0
    loop: start=0, step=1, limit=4
    $region2: #{tpu_custom_call.1} parent=1 // loop_pre_header
      _
    $region3: #{tpu_custom_call.1} parent=1 // loop_header
      %s24 = sphi 0, %s28
      %p25 = scmp.ge.s32.totalorder %s24, 4
      %s34 = sphi 0, %s36
      %s37 = sphi 0, %s34
      %s38 = sphi 0, %s37
      %s54 = sphi 0, %s38
      %s58 = sphi 0, %s58
      %s60 = sphi 0, %s58
      %s61 = sphi 0, %s60
      %s75 = sphi 0, %s61
      %s79 = sphi 0, %s79
      %s81 = sphi 0, %s79
      %s82 = sphi 0, %s81
      %s96 = sphi 0, %s82
      %s100 = sphi 0, %s100
      %s102 = sphi 0, %s100
      %s103 = sphi 0, %s102
      %s117 = sphi 0, %s103
      %s121 = sphi 0, %s121
      %s123 = sphi 0, %s121
      %s124 = sphi 0, %s123
      %s138 = sphi 0, %s124
      %s142 = sphi 0, %s142
      %s144 = sphi 0, %s142
      %s145 = sphi 0, %s144
      %s159 = sphi 0, %s145
      %s163 = sphi 0, %s163
      %s165 = sphi 0, %s163
      %s166 = sphi 0, %s165
      %s180 = sphi 0, %s166
      %s184 = sphi 0, %s184
      %s186 = sphi 0, %s184
      %s187 = sphi 0, %s186
      %s201 = sphi 0, %s187
      %s205 = sphi 0, %s205
      %s207 = sphi 0, %s205
      %s208 = sphi 0, %s207
      %s222 = sphi 0, %s208
      %s228 = sphi 0, %s230
      %s231 = sphi 0, %s228
      %s232 = sphi 0, %s231
      %s248 = sphi 0, %s232
    $region4: #{tpu_custom_call.1} parent=1 // loop_header_branch
      %27 = sbr.rel (%p25) target = $region8
    $region5: #{tpu_custom_call.1} parent=1 // loop_body
      %s29 = ssub.s32 %s24, 1
      %s30 = ssub.s32 %s24, 2
      %s31 = sadd.s32 %s24, 1
      %s32 = ssub.s32 %s24, %s31
      %p33 = scmp.eq.s32.totalorder %s32, 0
      %s35 = sadd.s32 %s34, 1
      %s36 = scalar_select %p33, %s34, %s35
      %p39 = pneg %p33
      %p40 = scmp.eq.s32.totalorder %s24, 1
      %p41 = por %p39, %p40
      %p42 = scmp.ne.s32.totalorder %s34, %s37
      %p43 = scmp.eq.s32.totalorder %s24, 0
      %p44 = por %p42, %p43
      %p45 = scmp.ne.s32.totalorder %s34, %s37
      %p46 = scmp.eq.s32.totalorder %s29, 1
      %p47 = por %p45, %p46
      %p48 = scmp.ne.s32.totalorder %s37, %s38
      %p49 = scmp.eq.s32.totalorder %s29, 0
      %p50 = por %p48, %p49
      %p51 = scmp.ne.s32.totalorder %s37, %s38
      %p52 = scmp.eq.s32.totalorder %s30, 1
      %p53 = por %p51, %p52
      %p55 = scmp.ne.s32.totalorder %s38, %s54
      %p56 = scmp.eq.s32.totalorder %s30, 0
      %p57 = por %p55, %p56
      %s59 = sadd.s32 %s58, 1
      %p62 = scmp.eq.s32.totalorder %s24, 1
      %p63 = scmp.ne.s32.totalorder %s58, %s60
      %p64 = scmp.eq.s32.totalorder %s24, 0
      %p65 = por %p63, %p64
      %p66 = scmp.ne.s32.totalorder %s58, %s60
      %p67 = scmp.eq.s32.totalorder %s29, 1
      %p68 = por %p66, %p67
      %p69 = scmp.ne.s32.totalorder %s60, %s61
      %p70 = scmp.eq.s32.totalorder %s29, 0
      %p71 = por %p69, %p70
      %p72 = scmp.ne.s32.totalorder %s60, %s61
      %p73 = scmp.eq.s32.totalorder %s30, 1
      %p74 = por %p72, %p73
      %p76 = scmp.ne.s32.totalorder %s61, %s75
      %p77 = scmp.eq.s32.totalorder %s30, 0
      %p78 = por %p76, %p77
      %s80 = sadd.s32 %s79, 1
      %p83 = scmp.eq.s32.totalorder %s24, 1
      %p84 = scmp.ne.s32.totalorder %s79, %s81
      %p85 = scmp.eq.s32.totalorder %s24, 0
      %p86 = por %p84, %p85
      %p87 = scmp.ne.s32.totalorder %s79, %s81
      %p88 = scmp.eq.s32.totalorder %s29, 1
      %p89 = por %p87, %p88
      %p90 = scmp.ne.s32.totalorder %s81, %s82
      %p91 = scmp.eq.s32.totalorder %s29, 0
      %p92 = por %p90, %p91
      %p93 = scmp.ne.s32.totalorder %s81, %s82
      %p94 = scmp.eq.s32.totalorder %s30, 1
      %p95 = por %p93, %p94
      %p97 = scmp.ne.s32.totalorder %s82, %s96
      %p98 = scmp.eq.s32.totalorder %s30, 0
      %p99 = por %p97, %p98
      %s101 = sadd.s32 %s100, 1
      %p104 = scmp.eq.s32.totalorder %s24, 1
      %p105 = scmp.ne.s32.totalorder %s100, %s102
      %p106 = scmp.eq.s32.totalorder %s24, 0
      %p107 = por %p105, %p106
      %p108 = scmp.ne.s32.totalorder %s100, %s102
      %p109 = scmp.eq.s32.totalorder %s29, 1
      %p110 = por %p108, %p109
      %p111 = scmp.ne.s32.totalorder %s102, %s103
      %p112 = scmp.eq.s32.totalorder %s29, 0
      %p113 = por %p111, %p112
      %p114 = scmp.ne.s32.totalorder %s102, %s103
      %p115 = scmp.eq.s32.totalorder %s30, 1
      %p116 = por %p114, %p115
      %p118 = scmp.ne.s32.totalorder %s103, %s117
      %p119 = scmp.eq.s32.totalorder %s30, 0
      %p120 = por %p118, %p119
      %s122 = sadd.s32 %s121, 1
      %p125 = scmp.eq.s32.totalorder %s24, 1
      %p126 = scmp.ne.s32.totalorder %s121, %s123
      %p127 = scmp.eq.s32.totalorder %s24, 0
      %p128 = por %p126, %p127
      %p129 = scmp.ne.s32.totalorder %s121, %s123
      %p130 = scmp.eq.s32.totalorder %s29, 1
      %p131 = por %p129, %p130
      %p132 = scmp.ne.s32.totalorder %s123, %s124
      %p133 = scmp.eq.s32.totalorder %s29, 0
      %p134 = por %p132, %p133
      %p135 = scmp.ne.s32.totalorder %s123, %s124
      %p136 = scmp.eq.s32.totalorder %s30, 1
      %p137 = por %p135, %p136
      %p139 = scmp.ne.s32.totalorder %s124, %s138
      %p140 = scmp.eq.s32.totalorder %s30, 0
      %p141 = por %p139, %p140
      %s143 = sadd.s32 %s142, 1
      %p146 = scmp.eq.s32.totalorder %s24, 1
      %p147 = scmp.ne.s32.totalorder %s142, %s144
      %p148 = scmp.eq.s32.totalorder %s24, 0
      %p149 = por %p147, %p148
      %p150 = scmp.ne.s32.totalorder %s142, %s144
      %p151 = scmp.eq.s32.totalorder %s29, 1
      %p152 = por %p150, %p151
      %p153 = scmp.ne.s32.totalorder %s144, %s145
      %p154 = scmp.eq.s32.totalorder %s29, 0
      %p155 = por %p153, %p154
      %p156 = scmp.ne.s32.totalorder %s144, %s145
      %p157 = scmp.eq.s32.totalorder %s30, 1
      %p158 = por %p156, %p157
      %p160 = scmp.ne.s32.totalorder %s145, %s159
      %p161 = scmp.eq.s32.totalorder %s30, 0
      %p162 = por %p160, %p161
      %s164 = sadd.s32 %s163, 1
      %p167 = scmp.eq.s32.totalorder %s24, 1
      %p168 = scmp.ne.s32.totalorder %s163, %s165
      %p169 = scmp.eq.s32.totalorder %s24, 0
      %p170 = por %p168, %p169
      %p171 = scmp.ne.s32.totalorder %s163, %s165
      %p172 = scmp.eq.s32.totalorder %s29, 1
      %p173 = por %p171, %p172
      %p174 = scmp.ne.s32.totalorder %s165, %s166
      %p175 = scmp.eq.s32.totalorder %s29, 0
      %p176 = por %p174, %p175
      %p177 = scmp.ne.s32.totalorder %s165, %s166
      %p178 = scmp.eq.s32.totalorder %s30, 1
      %p179 = por %p177, %p178
      %p181 = scmp.ne.s32.totalorder %s166, %s180
      %p182 = scmp.eq.s32.totalorder %s30, 0
      %p183 = por %p181, %p182
      %s185 = sadd.s32 %s184, 1
      %p188 = scmp.eq.s32.totalorder %s24, 1
      %p189 = scmp.ne.s32.totalorder %s184, %s186
      %p190 = scmp.eq.s32.totalorder %s24, 0
      %p191 = por %p189, %p190
      %p192 = scmp.ne.s32.totalorder %s184, %s186
      %p193 = scmp.eq.s32.totalorder %s29, 1
      %p194 = por %p192, %p193
      %p195 = scmp.ne.s32.totalorder %s186, %s187
      %p196 = scmp.eq.s32.totalorder %s29, 0
      %p197 = por %p195, %p196
      %p198 = scmp.ne.s32.totalorder %s186, %s187
      %p199 = scmp.eq.s32.totalorder %s30, 1
      %p200 = por %p198, %p199
      %p202 = scmp.ne.s32.totalorder %s187, %s201
      %p203 = scmp.eq.s32.totalorder %s30, 0
      %p204 = por %p202, %p203
      %s206 = sadd.s32 %s205, 1
      %p209 = scmp.eq.s32.totalorder %s24, 1
      %p210 = scmp.ne.s32.totalorder %s205, %s207
      %p211 = scmp.eq.s32.totalorder %s24, 0
      %p212 = por %p210, %p211
      %p213 = scmp.ne.s32.totalorder %s205, %s207
      %p214 = scmp.eq.s32.totalorder %s29, 1
      %p215 = por %p213, %p214
      %p216 = scmp.ne.s32.totalorder %s207, %s208
      %p217 = scmp.eq.s32.totalorder %s29, 0
      %p218 = por %p216, %p217
      %p219 = scmp.ne.s32.totalorder %s207, %s208
      %p220 = scmp.eq.s32.totalorder %s30, 1
      %p221 = por %p219, %p220
      %p223 = scmp.ne.s32.totalorder %s208, %s222
      %p224 = scmp.eq.s32.totalorder %s30, 0
      %p225 = por %p223, %p224
      %s226 = ssub.s32 %s24, %s31
      %p227 = scmp.eq.s32.totalorder %s226, 0
      %s229 = sadd.s32 %s228, 1
      %s230 = scalar_select %p227, %s228, %s229
      %p233 = pneg %p227
      %p234 = scmp.eq.s32.totalorder %s24, 1
      %p235 = por %p233, %p234
      %p236 = scmp.ne.s32.totalorder %s228, %s231
      %p237 = scmp.eq.s32.totalorder %s24, 0
      %p238 = por %p236, %p237
      %p239 = scmp.ne.s32.totalorder %s228, %s231
      %p240 = scmp.eq.s32.totalorder %s29, 1
      %p241 = por %p239, %p240
      %p242 = scmp.ne.s32.totalorder %s231, %s232
      %p243 = scmp.eq.s32.totalorder %s29, 0
      %p244 = por %p242, %p243
      %p245 = scmp.ne.s32.totalorder %s231, %s232
      %p246 = scmp.eq.s32.totalorder %s30, 1
      %p247 = por %p245, %p246
      %p249 = scmp.ne.s32.totalorder %s232, %s248
      %p250 = scmp.eq.s32.totalorder %s30, 0
      %p251 = por %p249, %p250
      %p252 = scmp.le.s32.totalorder 1, %s24
      %p253 = scmp.lt.s32.totalorder %s24, 3
      %p254 = pnand %p252, %p253
      %p255 = pneg %p254
      // Predicated region
      $region9: #{tpu_custom_call.1} parent=5 // pred_check
        _
      $region10: #{tpu_custom_call.1} parent=5 // pred_check_branch
        %257 = sbr.rel (%p254) target = $region12
      $region11: #{tpu_custom_call.1} parent=5 // pred_region
        %s258 = ssub.s32 %s24, 1
        // Predicated region
        $region13: #{tpu_custom_call.1} parent=11 // pred_check
          %p259 = pneg %p71
        $region14: #{tpu_custom_call.1} parent=11 // pred_check_branch
          %261 = sbr.rel (%p259) target = $region16
        $region15: #{tpu_custom_call.1} parent=11 // pred_region
          %s263 = ssub.s32 6848, 6848
          %264 = vsyncadd [#allocation7], %s263
          %s265 = sshll.u32 [#allocation6], 4
          %s266 = int_to_ptr.vmem [resolvable:$true] %s265
          %271 = dma.hbm_to_vmem [thread:$0]  %s1, 6848, %s266, [#allocation7], 64, 64, 4
        $region16: #{tpu_custom_call.1} parent=11 // pred_fallthru
          _
        // Predicated region
        $region17: #{tpu_custom_call.1} parent=11 // pred_check
          %p272 = pneg %p92
        $region18: #{tpu_custom_call.1} parent=11 // pred_check_branch
          %274 = sbr.rel (%p272) target = $region20
        $region19: #{tpu_custom_call.1} parent=11 // pred_region
          _
        $region20: #{tpu_custom_call.1} parent=11 // pred_fallthru
          _
        // Predicated region
        $region21: #{tpu_custom_call.1} parent=11 // pred_check
          %p275 = pneg %p113
        $region22: #{tpu_custom_call.1} parent=11 // pred_check_branch
          %277 = sbr.rel (%p275) target = $region24
        $region23: #{tpu_custom_call.1} parent=11 // pred_region
          _
        $region24: #{tpu_custom_call.1} parent=11 // pred_fallthru
          _
        // Predicated region
        $region25: #{tpu_custom_call.1} parent=11 // pred_check
          %p278 = pneg %p134
        $region26: #{tpu_custom_call.1} parent=11 // pred_check_branch
          %280 = sbr.rel (%p278) target = $region28
        $region27: #{tpu_custom_call.1} parent=11 // pred_region
          _
        $region28: #{tpu_custom_call.1} parent=11 // pred_fallthru
          _
        // Predicated region
        $region29: #{tpu_custom_call.1} parent=11 // pred_check
          %p281 = pneg %p155
        $region30: #{tpu_custom_call.1} parent=11 // pred_check_branch
          %283 = sbr.rel (%p281) target = $region32
        $region31: #{tpu_custom_call.1} parent=11 // pred_region
          _
        $region32: #{tpu_custom_call.1} parent=11 // pred_fallthru
          _
        // Predicated region
        $region33: #{tpu_custom_call.1} parent=11 // pred_check
          %p284 = pneg %p176
        $region34: #{tpu_custom_call.1} parent=11 // pred_check_branch
          %286 = sbr.rel (%p284) target = $region36
        $region35: #{tpu_custom_call.1} parent=11 // pred_region
          _
        $region36: #{tpu_custom_call.1} parent=11 // pred_fallthru
          _
        // Predicated region
        $region37: #{tpu_custom_call.1} parent=11 // pred_check
          %p287 = pneg %p197
        $region38: #{tpu_custom_call.1} parent=11 // pred_check_branch
          %289 = sbr.rel (%p287) target = $region40
        $region39: #{tpu_custom_call.1} parent=11 // pred_region
          _
        $region40: #{tpu_custom_call.1} parent=11 // pred_fallthru
          _
        // Predicated region
        $region41: #{tpu_custom_call.1} parent=11 // pred_check
          %p290 = pneg %p218
        $region42: #{tpu_custom_call.1} parent=11 // pred_check_branch
          %292 = sbr.rel (%p290) target = $region44
        $region43: #{tpu_custom_call.1} parent=11 // pred_region
          _
        $region44: #{tpu_custom_call.1} parent=11 // pred_fallthru
          _
      $region12: #{tpu_custom_call.1} parent=5 // pred_fallthru
        _
      %p293 = scmp.lt.s32.totalorder %s24, 2
      // Predicated region
      $region45: #{tpu_custom_call.1} parent=5 // pred_check
        %p294 = pneg %p293
      $region46: #{tpu_custom_call.1} parent=5 // pred_check_branch
        %296 = sbr.rel (%p294) target = $region48
      $region47: #{tpu_custom_call.1} parent=5 // pred_region
        // Predicated region
        $region49: #{tpu_custom_call.1} parent=47 // pred_check
          %p297 = pneg %p44
        $region50: #{tpu_custom_call.1} parent=47 // pred_check_branch
          %299 = sbr.rel (%p297) target = $region52
        $region51: #{tpu_custom_call.1} parent=47 // pred_region
          %s300 = sand.u32 %s34, 1
          %s301 = scalar_lea.sflag [#allocation4], %s300
          %s302 = sand.u32 %s34, 1
          %s303 = smul.addr %s302, 224
          %s304 = scalar_lea.vmem [#allocation3], %s303
          %s305 = smul.u32 4, %s24
          %s307 = ssub.s32 3584, 3584
          %308 = vsyncadd %s301, %s307
          %s309 = smul.addr %s305, 7
          %s310 = smul.addr %s309, 128
          %s311 = scalar_lea.hbm %s0, %s310
          %s312 = sshll.u32 %s304, 4
          %s313 = int_to_ptr.vmem [resolvable:$true] %s312
          %318 = dma.hbm_to_vmem [thread:$0]  %s311, 3584, %s313, %s301, 896, 896, 56
        $region52: #{tpu_custom_call.1} parent=47 // pred_fallthru
          _
      $region48: #{tpu_custom_call.1} parent=5 // pred_fallthru
        _
      %p319 = scmp.le.s32.totalorder 1, %s24
      %p320 = scmp.lt.s32.totalorder %s24, 3
      %p321 = pnand %p319, %p320
      %p322 = pneg %p321
      // Predicated region
      $region53: #{tpu_custom_call.1} parent=5 // pred_check
        _
      $region54: #{tpu_custom_call.1} parent=5 // pred_check_branch
        %324 = sbr.rel (%p321) target = $region56
      $region55: #{tpu_custom_call.1} parent=5 // pred_region
        %s325 = ssub.s32 %s24, 1
        %s326 = sand.u32 %s37, 1
        %s327 = scalar_lea.sflag [#allocation4], %s326
        %s328 = sand.u32 %s37, 1
        %s329 = smul.addr %s328, 224
        %s330 = scalar_lea.vmem [#allocation3], %s329
        // Predicated region
        $region57: #{tpu_custom_call.1} parent=55 // pred_check
          %p331 = pneg %p50
        $region58: #{tpu_custom_call.1} parent=55 // pred_check_branch
          %333 = sbr.rel (%p331) target = $region60
        $region59: #{tpu_custom_call.1} parent=55 // pred_region
          %334 = dma.done %s327, 3584
        $region60: #{tpu_custom_call.1} parent=55 // pred_fallthru
          _
        // Predicated region
        $region61: #{tpu_custom_call.1} parent=55 // pred_check
          %p335 = pneg %p71
        $region62: #{tpu_custom_call.1} parent=55 // pred_check_branch
          %337 = sbr.rel (%p335) target = $region64
        $region63: #{tpu_custom_call.1} parent=55 // pred_region
          %338 = dma.done [#allocation7], 6848
        $region64: #{tpu_custom_call.1} parent=55 // pred_fallthru
          _
        %s339 = sand.u32 %s37, 1
        %s340 = scalar_lea.sflag [#allocation4], %s339
        %s341 = sand.u32 %s37, 1
        %s342 = smul.addr %s341, 224
        %s343 = scalar_lea.vmem [#allocation3], %s342
        %p344 = pneg %p50
        %p345 = pneg %p47
        %p346 = pneg %p71
        %p347 = pneg %p68
        %p348 = pneg %p92
        %p349 = pneg %p89
        %p350 = pneg %p113
        %p351 = pneg %p110
        %p352 = pneg %p134
        %p353 = pneg %p131
        %p354 = pneg %p155
        %p355 = pneg %p152
        %p356 = pneg %p176
        %p357 = pneg %p173
        %p358 = pneg %p197
        %p359 = pneg %p194
        %p360 = pneg %p218
        %p361 = pneg %p215
        %p362 = pneg %p244
        %p363 = pneg %p241
        %s364 = sand.u32 %s231, 1
        %s365 = scalar_lea.sflag [#allocation5], %s364
        %s366 = sand.u32 %s231, 1
        %s367 = scalar_lea.vmem [#allocation8], %s366
        %s368 = smul.u32 4, %s29
        %v370 = vld [vmem:[%s330] sm:$0xff]
        %v371 = vld [vmem:[%s330 + $0x8] sm:$0xff]
        %v372 = vld [vmem:[%s330 + $0x10] sm:$0xff]
        %v373 = vld [vmem:[%s330 + $0x18] sm:$0xff]
        %v374 = vld [vmem:[%s330 + $0x20] sm:$0xff]
        %v375 = vld [vmem:[%s330 + $0x28] sm:$0xff]
        %v376 = vld [vmem:[%s330 + $0x30] sm:$0xff]
        %v377 = vld [vmem:[%s330 + $0x38] sm:$0xff]
        %v378 = vld [vmem:[%s330 + $0x40] sm:$0xff]
        %v379 = vld [vmem:[%s330 + $0x48] sm:$0xff]
        %v380 = vld [vmem:[%s330 + $0x50] sm:$0xff]
        %v381 = vld [vmem:[%s330 + $0x58] sm:$0xff]
        %v382 = vld [vmem:[%s330 + $0x60] sm:$0xff]
        %v383 = vld [vmem:[%s330 + $0x68] sm:$0xff]
        %v384 = vld [vmem:[%s330 + $0x70] sm:$0xff]
        %v385 = vld [vmem:[%s330 + $0x78] sm:$0xff]
        %v386 = vld [vmem:[%s330 + $0x80] sm:$0xff]
        %v387 = vld [vmem:[%s330 + $0x88] sm:$0xff]
        %v388 = vld [vmem:[%s330 + $0x90] sm:$0xff]
        %v389 = vld [vmem:[%s330 + $0x98] sm:$0xff]
        %v390 = vld [vmem:[%s330 + $0xa0] sm:$0xff]
        %v391 = vld [vmem:[%s330 + $0xa8] sm:$0xff]
        %v392 = vld [vmem:[%s330 + $0xb0] sm:$0xff]
        %v393 = vld [vmem:[%s330 + $0xb8] sm:$0xff]
        %v394 = vld [vmem:[%s330 + $0xc0] sm:$0xff]
        %v395 = vld [vmem:[%s330 + $0xc8] sm:$0xff]
        %v396 = vld [vmem:[%s330 + $0xd0] sm:$0xff]
        %v397 = vld [vmem:[%s330 + $0xd8] sm:$0xff]
        %v398 = vpack.c.bf16 %v377, %v370
        %v399 = vpack.c.bf16 %v378, %v371
        %v400 = vpack.c.bf16 %v379, %v372
        %v401 = vpack.c.bf16 %v380, %v373
        %v402 = vpack.c.bf16 %v381, %v374
        %v403 = vpack.c.bf16 %v382, %v375
        %v404 = vpack.c.bf16 %v383, %v376
        %v405 = vpack.c.bf16 %v391, %v384
        %v406 = vpack.c.bf16 %v392, %v385
        %v407 = vpack.c.bf16 %v393, %v386
        %v408 = vpack.c.bf16 %v394, %v387
        %v409 = vpack.c.bf16 %v395, %v388
        %v410 = vpack.c.bf16 %v396, %v389
        %v411 = vpack.c.bf16 %v397, %v390
        %v412 = vld [vmem:[#allocation6] sm:$0xf]
        %v413 = vld [vmem:[#allocation6 + $0x4] sm:$0xf]
        %v414 = vld [vmem:[#allocation6 + $0x8] sm:$0xf]
        %v415 = vld [vmem:[#allocation6 + $0xc] sm:$0xf]
        %v416 = vld [vmem:[#allocation6 + $0x10] sm:$0xf]
        %v417 = vld [vmem:[#allocation6 + $0x14] sm:$0xf]
        %v418 = vld [vmem:[#allocation6 + $0x18] sm:$0xf]
        %v419 = vld [vmem:[#allocation6 + $0x1c] sm:$0xf]
        %v420 = vld [vmem:[#allocation6 + $0x20] sm:$0xf]
        %v421 = vld [vmem:[#allocation6 + $0x24] sm:$0xf]
        %v422 = vld [vmem:[#allocation6 + $0x28] sm:$0xf]
        %v423 = vld [vmem:[#allocation6 + $0x2c] sm:$0xf]
        %v424 = vld [vmem:[#allocation6 + $0x30] sm:$0xf]
        %v425 = vld [vmem:[#allocation6 + $0x34] sm:$0xf]
        %v426 = vld [vmem:[#allocation6 + $0x38] sm:$0xf]
        %v427 = vld [vmem:[#allocation6 + $0x3c] sm:$0xf]
        %v428 = vld [vmem:[#allocation6 + $0x40] sm:$0xf]
        %v429 = vld [vmem:[#allocation6 + $0x44] sm:$0xf]
        %v430 = vld [vmem:[#allocation6 + $0x48] sm:$0xf]
        %v431 = vld [vmem:[#allocation6 + $0x4c] sm:$0xf]
        %v432 = vld [vmem:[#allocation6 + $0x50] sm:$0xf]
        %v433 = vld [vmem:[#allocation6 + $0x54] sm:$0xf]
        %v434 = vld [vmem:[#allocation6 + $0x58] sm:$0xf]
        %v435 = vld [vmem:[#allocation6 + $0x5c] sm:$0xf]
        %v436 = vld [vmem:[#allocation6 + $0x60] sm:$0xf]
        %v437 = vld [vmem:[#allocation6 + $0x64] sm:$0xf]
        %v438 = vld [vmem:[#allocation6 + $0x68] sm:$0xf]
        %v439 = vld [vmem:[#allocation6 + $0x6c] sm:$0xf]
        %v440 = vld [vmem:[#allocation6 + $0x70] sm:$0xf]
        %v441 = vld [vmem:[#allocation6 + $0x74] sm:$0xf]
        %v442 = vld [vmem:[#allocation6 + $0x78] sm:$0xf]
        %v443 = vld [vmem:[#allocation6 + $0x7c] sm:$0xf]
        %v444 = vld [vmem:[#allocation6 + $0x80] sm:$0xf]
        %v445 = vld [vmem:[#allocation6 + $0x84] sm:$0xf]
        %v446 = vld [vmem:[#allocation6 + $0x88] sm:$0xf]
        %v447 = vld [vmem:[#allocation6 + $0x8c] sm:$0xf]
        %v448 = vld [vmem:[#allocation6 + $0x90] sm:$0xf]
        %v449 = vld [vmem:[#allocation6 + $0x94] sm:$0xf]
        %v450 = vld [vmem:[#allocation6 + $0x98] sm:$0xf]
        %v451 = vld [vmem:[#allocation6 + $0x9c] sm:$0xf]
        %v452 = vld [vmem:[#allocation6 + $0xa0] sm:$0xf]
        %v453 = vld [vmem:[#allocation6 + $0xa4] sm:$0xf]
        %v454 = vld [vmem:[#allocation6 + $0xa8] sm:$0xf]
        %v455 = vld [vmem:[#allocation6 + $0xac] sm:$0xf]
        %v456 = vld [vmem:[#allocation6 + $0xb0] sm:$0xf]
        %v457 = vld [vmem:[#allocation6 + $0xb4] sm:$0xf]
        %v458 = vld [vmem:[#allocation6 + $0xb8] sm:$0xf]
        %v459 = vld [vmem:[#allocation6 + $0xbc] sm:$0xf]
        %v460 = vld [vmem:[#allocation6 + $0xc0] sm:$0xf]
        %v461 = vld [vmem:[#allocation6 + $0xc4] sm:$0xf]
        %v462 = vld [vmem:[#allocation6 + $0xc8] sm:$0xf]
        %v463 = vld [vmem:[#allocation6 + $0xcc] sm:$0xf]
        %v464 = vld [vmem:[#allocation6 + $0xd0] sm:$0xf]
        %v465 = vld [vmem:[#allocation6 + $0xd4] sm:$0xf]
        %v466 = vld [vmem:[#allocation6 + $0xd8] sm:$0xf]
        %v467 = vld [vmem:[#allocation6 + $0xdc] sm:$0xf]
        %v468 = vld [vmem:[#allocation6 + $0xe0] sm:$0xf]
        %v469 = vld [vmem:[#allocation6 + $0xe4] sm:$0xf]
        %v470 = vld [vmem:[#allocation6 + $0xe8] sm:$0xf]
        %v471 = vld [vmem:[#allocation6 + $0xec] sm:$0xf]
        %v472 = vld [vmem:[#allocation6 + $0xf0] sm:$0xf]
        %v473 = vld [vmem:[#allocation6 + $0xf4] sm:$0xf]
        %v474 = vld [vmem:[#allocation6 + $0xf8] sm:$0xf]
        %v475 = vld [vmem:[#allocation6 + $0xfc] sm:$0xf]
        %v476 = vld [vmem:[#allocation6 + $0x100] sm:$0xf]
        %v477 = vld [vmem:[#allocation6 + $0x104] sm:$0xf]
        %v478 = vld [vmem:[#allocation6 + $0x108] sm:$0xf]
        %v479 = vld [vmem:[#allocation6 + $0x10c] sm:$0xf]
        %v480 = vld [vmem:[#allocation6 + $0x110] sm:$0xf]
        %v481 = vld [vmem:[#allocation6 + $0x114] sm:$0xf]
        %v482 = vld [vmem:[#allocation6 + $0x118] sm:$0xf]
        %v483 = vld [vmem:[#allocation6 + $0x11c] sm:$0xf]
        %v484 = vld [vmem:[#allocation6 + $0x120] sm:$0xf]
        %v485 = vld [vmem:[#allocation6 + $0x124] sm:$0xf]
        %v486 = vld [vmem:[#allocation6 + $0x128] sm:$0xf]
        %v487 = vld [vmem:[#allocation6 + $0x12c] sm:$0xf]
        %v488 = vld [vmem:[#allocation6 + $0x130] sm:$0xf]
        %v489 = vld [vmem:[#allocation6 + $0x134] sm:$0xf]
        %v490 = vld [vmem:[#allocation6 + $0x138] sm:$0xf]
        %v491 = vld [vmem:[#allocation6 + $0x13c] sm:$0xf]
        %v492 = vld [vmem:[#allocation6 + $0x140] sm:$0xf]
        %v493 = vld [vmem:[#allocation6 + $0x144] sm:$0xf]
        %v494 = vld [vmem:[#allocation6 + $0x148] sm:$0xf]
        %v495 = vld [vmem:[#allocation6 + $0x14c] sm:$0xf]
        %v496 = vld [vmem:[#allocation6 + $0x150] sm:$0xf]
        %v497 = vld [vmem:[#allocation6 + $0x154] sm:$0xf]
        %v498 = vld [vmem:[#allocation6 + $0x158] sm:$0xf]
        %v499 = vld [vmem:[#allocation6 + $0x15c] sm:$0xf]
        %v500 = vld [vmem:[#allocation6 + $0x160] sm:$0xf]
        %v501 = vld [vmem:[#allocation6 + $0x164] sm:$0xf]
        %v502 = vld [vmem:[#allocation6 + $0x168] sm:$0xf]
        %v503 = vld [vmem:[#allocation6 + $0x16c] sm:$0xf]
        %v504 = vld [vmem:[#allocation6 + $0x170] sm:$0xf]
        %v505 = vld [vmem:[#allocation6 + $0x174] sm:$0xf]
        %v506 = vld [vmem:[#allocation6 + $0x178] sm:$0xf]
        %v507 = vld [vmem:[#allocation6 + $0x17c] sm:$0xf]
        %v508 = vld [vmem:[#allocation6 + $0x180] sm:$0xf]
        %v509 = vld [vmem:[#allocation6 + $0x184] sm:$0xf]
        %v510 = vld [vmem:[#allocation6 + $0x188] sm:$0xf]
        %v511 = vld [vmem:[#allocation6 + $0x18c] sm:$0xf]
        %v512 = vld [vmem:[#allocation6 + $0x190] sm:$0xf]
        %v513 = vld [vmem:[#allocation6 + $0x194] sm:$0xf]
        %v514 = vld [vmem:[#allocation6 + $0x198] sm:$0xf]
        %v515 = vld [vmem:[#allocation6 + $0x19c] sm:$0xf]
        %v516 = vld [vmem:[#allocation6 + $0x1a0] sm:$0xf]
        %v517 = vld [vmem:[#allocation6 + $0x1a4] sm:$0xf]
        %v518 = vld [vmem:[#allocation6 + $0x1a8] sm:$0x3]
        %v519 = vld [vmem:[%s2] sm:$0x1]
        %v521 = vlaneseq
        %v522 = vshrl.u32 %v521, 7
        %v523 = vsub.s32 0, %v522
        %v524 = vrot.slane %v519, %v523
        %v633 = vunpack.c.l.b16 %v412
        %v634 = vunpack.c.l.b16 %v413
        %v635 = vunpack.c.l.b16 %v414
        %v636 = vunpack.c.l.b16 %v415
        %v637 = vunpack.c.l.b16 %v416
        %v638 = vunpack.c.l.b16 %v417
        %v639 = vunpack.c.l.b16 %v418
        %v640 = vunpack.c.l.b16 %v419
        %v641 = vunpack.c.l.b16 %v420
        %v642 = vunpack.c.l.b16 %v421
        %v643 = vunpack.c.l.b16 %v422
        %v644 = vunpack.c.l.b16 %v423
        %v645 = vunpack.c.l.b16 %v424
        %v646 = vunpack.c.l.b16 %v425
        %v647 = vunpack.c.l.b16 %v426
        %v648 = vunpack.c.l.b16 %v427
        %v649 = vunpack.c.l.b16 %v428
        %v650 = vunpack.c.l.b16 %v429
        %v651 = vunpack.c.l.b16 %v430
        %v652 = vunpack.c.l.b16 %v431
        %v653 = vunpack.c.l.b16 %v432
        %v654 = vunpack.c.l.b16 %v433
        %v655 = vunpack.c.l.b16 %v434
        %v656 = vunpack.c.l.b16 %v435
        %v657 = vunpack.c.l.b16 %v436
        %v658 = vunpack.c.l.b16 %v437
        %v659 = vunpack.c.l.b16 %v438
        %v660 = vunpack.c.l.b16 %v439
        %v661 = vunpack.c.l.b16 %v440
        %v662 = vunpack.c.l.b16 %v441
        %v663 = vunpack.c.l.b16 %v442
        %v664 = vunpack.c.l.b16 %v443
        %v665 = vunpack.c.l.b16 %v444
        %v666 = vunpack.c.l.b16 %v445
        %v667 = vunpack.c.l.b16 %v446
        %v668 = vunpack.c.l.b16 %v447
        %v669 = vunpack.c.l.b16 %v448
        %v670 = vunpack.c.l.b16 %v449
        %v671 = vunpack.c.l.b16 %v450
        %v672 = vunpack.c.l.b16 %v451
        %v673 = vunpack.c.l.b16 %v452
        %v674 = vunpack.c.l.b16 %v453
        %v675 = vunpack.c.l.b16 %v454
        %v676 = vunpack.c.l.b16 %v455
        %v677 = vunpack.c.l.b16 %v456
        %v678 = vunpack.c.l.b16 %v457
        %v679 = vunpack.c.l.b16 %v458
        %v680 = vunpack.c.l.b16 %v459
        %v681 = vunpack.c.l.b16 %v460
        %v682 = vunpack.c.l.b16 %v461
        %v683 = vunpack.c.l.b16 %v462
        %v684 = vunpack.c.l.b16 %v463
        %v685 = vunpack.c.l.b16 %v464
        %v686 = vunpack.c.l.b16 %v465
        %v687 = vunpack.c.l.b16 %v466
        %v688 = vunpack.c.l.b16 %v467
        %v689 = vunpack.c.l.b16 %v468
        %v690 = vunpack.c.l.b16 %v469
        %v691 = vunpack.c.l.b16 %v470
        %v692 = vunpack.c.l.b16 %v471
        %v693 = vunpack.c.l.b16 %v472
        %v694 = vunpack.c.l.b16 %v473
        %v695 = vunpack.c.l.b16 %v474
        %v696 = vunpack.c.l.b16 %v475
        %v697 = vunpack.c.l.b16 %v476
        %v698 = vunpack.c.l.b16 %v477
        %v699 = vunpack.c.l.b16 %v478
        %v700 = vunpack.c.l.b16 %v479
        %v701 = vunpack.c.l.b16 %v480
        %v702 = vunpack.c.l.b16 %v481
        %v703 = vunpack.c.l.b16 %v482
        %v704 = vunpack.c.l.b16 %v483
        %v705 = vunpack.c.l.b16 %v484
        %v706 = vunpack.c.l.b16 %v485
        %v707 = vunpack.c.l.b16 %v486
        %v708 = vunpack.c.l.b16 %v487
        %v709 = vunpack.c.l.b16 %v488
        %v710 = vunpack.c.l.b16 %v489
        %v711 = vunpack.c.l.b16 %v490
        %v712 = vunpack.c.l.b16 %v491
        %v713 = vunpack.c.l.b16 %v492
        %v714 = vunpack.c.l.b16 %v493
        %v715 = vunpack.c.l.b16 %v494
        %v716 = vunpack.c.l.b16 %v495
        %v717 = vunpack.c.l.b16 %v496
        %v718 = vunpack.c.l.b16 %v497
        %v719 = vunpack.c.l.b16 %v498
        %v720 = vunpack.c.l.b16 %v499
        %v721 = vunpack.c.l.b16 %v500
        %v722 = vunpack.c.l.b16 %v501
        %v723 = vunpack.c.l.b16 %v502
        %v724 = vunpack.c.l.b16 %v503
        %v725 = vunpack.c.l.b16 %v504
        %v726 = vunpack.c.l.b16 %v505
        %v727 = vunpack.c.l.b16 %v506
        %v728 = vunpack.c.l.b16 %v507
        %v729 = vunpack.c.l.b16 %v508
        %v730 = vunpack.c.l.b16 %v509
        %v731 = vunpack.c.l.b16 %v510
        %v732 = vunpack.c.l.b16 %v511
        %v733 = vunpack.c.l.b16 %v512
        %v734 = vunpack.c.l.b16 %v513
        %v735 = vunpack.c.l.b16 %v514
        %v736 = vunpack.c.l.b16 %v515
        %v737 = vunpack.c.l.b16 %v516
        %v738 = vunpack.c.l.b16 %v517
        %v739 = vunpack.c.l.b16 %v518
        %v740 = vpack.c.b16 %v634, %v633
        %v741 = vpack.c.b16 %v636, %v635
        %v742 = vpack.c.b16 %v638, %v637
        %v743 = vpack.c.b16 %v640, %v639
        %v744 = vpack.c.b16 %v642, %v641
        %v745 = vpack.c.b16 %v644, %v643
        %v746 = vpack.c.b16 %v646, %v645
        %v747 = vpack.c.b16 %v648, %v647
        %v748 = vpack.c.b16 %v650, %v649
        %v749 = vpack.c.b16 %v652, %v651
        %v750 = vpack.c.b16 %v654, %v653
        %v751 = vpack.c.b16 %v656, %v655
        %v752 = vpack.c.b16 %v658, %v657
        %v753 = vpack.c.b16 %v660, %v659
        %v754 = vpack.c.b16 %v662, %v661
        %v755 = vpack.c.b16 %v664, %v663
        %v756 = vpack.c.b16 %v666, %v665
        %v757 = vpack.c.b16 %v668, %v667
        %v758 = vpack.c.b16 %v670, %v669
        %v759 = vpack.c.b16 %v672, %v671
        %v760 = vpack.c.b16 %v674, %v673
        %v761 = vpack.c.b16 %v676, %v675
        %v762 = vpack.c.b16 %v678, %v677
        %v763 = vpack.c.b16 %v680, %v679
        %v764 = vpack.c.b16 %v682, %v681
        %v765 = vpack.c.b16 %v684, %v683
        %v766 = vpack.c.b16 %v686, %v685
        %v767 = vpack.c.b16 %v688, %v687
        %v768 = vpack.c.b16 %v690, %v689
        %v769 = vpack.c.b16 %v692, %v691
        %v770 = vpack.c.b16 %v694, %v693
        %v771 = vpack.c.b16 %v696, %v695
        %v772 = vpack.c.b16 %v698, %v697
        %v773 = vpack.c.b16 %v700, %v699
        %v774 = vpack.c.b16 %v702, %v701
        %v775 = vpack.c.b16 %v704, %v703
        %v776 = vpack.c.b16 %v706, %v705
        %v777 = vpack.c.b16 %v708, %v707
        %v778 = vpack.c.b16 %v710, %v709
        %v779 = vpack.c.b16 %v712, %v711
        %v780 = vpack.c.b16 %v714, %v713
        %v781 = vpack.c.b16 %v716, %v715
        %v782 = vpack.c.b16 %v718, %v717
        %v783 = vpack.c.b16 %v720, %v719
        %v784 = vpack.c.b16 %v722, %v721
        %v785 = vpack.c.b16 %v724, %v723
        %v786 = vpack.c.b16 %v726, %v725
        %v787 = vpack.c.b16 %v728, %v727
        %v788 = vpack.c.b16 %v730, %v729
        %v789 = vpack.c.b16 %v732, %v731
        %v790 = vpack.c.b16 %v734, %v733
        %v791 = vpack.c.b16 %v736, %v735
        %v792 = vpack.c.b16 %v738, %v737
        %v793 = vpack.c.b16 %v739, %v739
        %vm847 = vcmask 678912
        %v849 = vsel %vm847, %v404, 0
        %v852 = vsel %vm847, %v411, 0
        %vm854 = vcmask 1040384
        %vm855 = vcmask 1041408
        %v856 = vsel %vm854, 4294967295, 65535
        %v857 = vsel %vm855, %v856, 0
        %v859 = vand.u32 %v793, %v857
        %861 = vmatprep.subr.bf16.mxu0 0
        %862 = vmatpush1.bf16.msra.mxu0 %v740
        %863 = vmatprep.subr.bf16.mxu0 0
        %864 = vmatpush1.bf16.msra.mxu0 %v741
        %865 = vmatprep.subr.bf16.mxu0 0
        %866 = vmatpush1.bf16.msra.mxu0 %v742
        %867 = vmatprep.subr.bf16.mxu0 0
        %868 = vmatpush1.bf16.msra.mxu0 %v743
        %869 = vmatprep.subr.bf16.mxu0 0
        %870 = vmatpush1.bf16.msra.mxu0 %v744
        %871 = vmatprep.subr.bf16.mxu0 0
        %872 = vmatpush1.bf16.msra.mxu0 %v745
        %873 = vmatprep.subr.bf16.mxu0 0
        %874 = vmatpush1.bf16.msra.mxu0 %v746
        %875 = vmatprep.subr.bf16.mxu0 0
        %876 = vmatpush1.bf16.msra.mxu0 %v747
        %877 = vmatprep.subr.bf16.mxu0 0
        %878 = vmatpush1.bf16.msra.mxu0 %v748
        %879 = vmatprep.subr.bf16.mxu0 0
        %880 = vmatpush1.bf16.msra.mxu0 %v749
        %881 = vmatprep.subr.bf16.mxu0 0
        %882 = vmatpush1.bf16.msra.mxu0 %v750
        %883 = vmatprep.subr.bf16.mxu0 0
        %884 = vmatpush1.bf16.msra.mxu0 %v751
        %885 = vmatprep.subr.bf16.mxu0 0
        %886 = vmatpush1.bf16.msra.mxu0 %v752
        %887 = vmatprep.subr.bf16.mxu0 0
        %888 = vmatpush1.bf16.msra.mxu0 %v753
        %889 = vmatprep.subr.bf16.mxu0 0
        %890 = vmatpush1.bf16.msra.mxu0 %v754
        %891 = vmatprep.subr.bf16.mxu0 0
        %892 = vmatpush1.bf16.msra.mxu0 %v755
        %893 = vmatprep.mubr.bf16.mxu0 %v399
        %894 = vmatmul.mubr.bf16.gmra.mrb[0].mxu0 %v398
        %v895 = vpop.f32.mrb[0].mxu0
        %v896 = vadd.f32 %v524, %v895
        %v897 = vpop.f32.mrb[0].mxu0
        %v898 = vpop.f32.mrb[0].mxu0
        %v899 = vadd.f32 %v524, %v898
        %v900 = vpop.f32.mrb[0].mxu0
        %901 = vmatprep.mubr.bf16.mxu0 %v406
        %902 = vmatmul.mubr.bf16.gmra.mrb[0].mxu0 %v405
        %v903 = vpop.f32.mrb[0].mxu0
        %v904 = vadd.f32 %v524, %v903
        %v905 = vpop.f32.mrb[0].mxu0
        %v906 = vpop.f32.mrb[0].mxu0
        %v907 = vadd.f32 %v524, %v906
        %v908 = vpop.f32.mrb[0].mxu0
        %909 = vdwg.mxu0
        %910 = vmatprep.subr.bf16.mxu0 0
        %911 = vmatpush1.bf16.msra.mxu0 %v756
        %912 = vmatprep.subr.bf16.mxu0 0
        %913 = vmatpush1.bf16.msra.mxu0 %v757
        %914 = vmatprep.subr.bf16.mxu0 0
        %915 = vmatpush1.bf16.msra.mxu0 %v758
        %916 = vmatprep.subr.bf16.mxu0 0
        %917 = vmatpush1.bf16.msra.mxu0 %v759
        %918 = vmatprep.subr.bf16.mxu0 0
        %919 = vmatpush1.bf16.msra.mxu0 %v760
        %920 = vmatprep.subr.bf16.mxu0 0
        %921 = vmatpush1.bf16.msra.mxu0 %v761
        %922 = vmatprep.subr.bf16.mxu0 0
        %923 = vmatpush1.bf16.msra.mxu0 %v762
        %924 = vmatprep.subr.bf16.mxu0 0
        %925 = vmatpush1.bf16.msra.mxu0 %v763
        %926 = vmatprep.subr.bf16.mxu0 0
        %927 = vmatpush1.bf16.msra.mxu0 %v764
        %928 = vmatprep.subr.bf16.mxu0 0
        %929 = vmatpush1.bf16.msra.mxu0 %v765
        %930 = vmatprep.subr.bf16.mxu0 0
        %931 = vmatpush1.bf16.msra.mxu0 %v766
        %932 = vmatprep.subr.bf16.mxu0 0
        %933 = vmatpush1.bf16.msra.mxu0 %v767
        %934 = vmatprep.subr.bf16.mxu0 0
        %935 = vmatpush1.bf16.msra.mxu0 %v768
        %936 = vmatprep.subr.bf16.mxu0 0
        %937 = vmatpush1.bf16.msra.mxu0 %v769
        %938 = vmatprep.subr.bf16.mxu0 0
        %939 = vmatpush1.bf16.msra.mxu0 %v770
        %940 = vmatprep.subr.bf16.mxu0 0
        %941 = vmatpush1.bf16.msra.mxu0 %v771
        %942 = vmatprep.mubr.bf16.mxu0 %v401
        %943 = vmatmul.mubr.bf16.gmra.mrb[0].mxu0 %v400
        %v944 = vpop.f32.mrb[0].mxu0
        %v945 = vadd.f32 %v896, %v944
        %v946 = vpop.f32.mrb[0].mxu0
        %v947 = vpop.f32.mrb[0].mxu0
        %v948 = vadd.f32 %v899, %v947
        %v949 = vpop.f32.mrb[0].mxu0
        %950 = vmatprep.mubr.bf16.mxu0 %v408
        %951 = vmatmul.mubr.bf16.gmra.mrb[0].mxu0 %v407
        %v952 = vpop.f32.mrb[0].mxu0
        %v953 = vadd.f32 %v904, %v952
        %v954 = vpop.f32.mrb[0].mxu0
        %v955 = vpop.f32.mrb[0].mxu0
        %v956 = vadd.f32 %v907, %v955
        %v957 = vpop.f32.mrb[0].mxu0
        %958 = vdwg.mxu0
        %959 = vmatprep.subr.bf16.mxu0 0
        %960 = vmatpush1.bf16.msra.mxu0 %v772
        %961 = vmatprep.subr.bf16.mxu0 0
        %962 = vmatpush1.bf16.msra.mxu0 %v773
        %963 = vmatprep.subr.bf16.mxu0 0
        %964 = vmatpush1.bf16.msra.mxu0 %v774
        %965 = vmatprep.subr.bf16.mxu0 0
        %966 = vmatpush1.bf16.msra.mxu0 %v775
        %967 = vmatprep.subr.bf16.mxu0 0
        %968 = vmatpush1.bf16.msra.mxu0 %v776
        %969 = vmatprep.subr.bf16.mxu0 0
        %970 = vmatpush1.bf16.msra.mxu0 %v777
        %971 = vmatprep.subr.bf16.mxu0 0
        %972 = vmatpush1.bf16.msra.mxu0 %v778
        %973 = vmatprep.subr.bf16.mxu0 0
        %974 = vmatpush1.bf16.msra.mxu0 %v779
        %975 = vmatprep.subr.bf16.mxu0 0
        %976 = vmatpush1.bf16.msra.mxu0 %v780
        %977 = vmatprep.subr.bf16.mxu0 0
        %978 = vmatpush1.bf16.msra.mxu0 %v781
        %979 = vmatprep.subr.bf16.mxu0 0
        %980 = vmatpush1.bf16.msra.mxu0 %v782
        %981 = vmatprep.subr.bf16.mxu0 0
        %982 = vmatpush1.bf16.msra.mxu0 %v783
        %983 = vmatprep.subr.bf16.mxu0 0
        %984 = vmatpush1.bf16.msra.mxu0 %v784
        %985 = vmatprep.subr.bf16.mxu0 0
        %986 = vmatpush1.bf16.msra.mxu0 %v785
        %987 = vmatprep.subr.bf16.mxu0 0
        %988 = vmatpush1.bf16.msra.mxu0 %v786
        %989 = vmatprep.subr.bf16.mxu0 0
        %990 = vmatpush1.bf16.msra.mxu0 %v787
        %991 = vmatprep.mubr.bf16.mxu0 %v403
        %992 = vmatmul.mubr.bf16.gmra.mrb[0].mxu0 %v402
        %v993 = vpop.f32.mrb[0].mxu0
        %v994 = vadd.f32 %v945, %v993
        %v995 = vpop.f32.mrb[0].mxu0
        %v996 = vpop.f32.mrb[0].mxu0
        %v997 = vadd.f32 %v948, %v996
        %v998 = vpop.f32.mrb[0].mxu0
        %999 = vmatprep.mubr.bf16.mxu0 %v410
        %1000 = vmatmul.mubr.bf16.gmra.mrb[0].mxu0 %v409
        %v1001 = vpop.f32.mrb[0].mxu0
        %v1002 = vadd.f32 %v953, %v1001
        %v1003 = vpop.f32.mrb[0].mxu0
        %v1004 = vpop.f32.mrb[0].mxu0
        %v1005 = vadd.f32 %v956, %v1004
        %v1006 = vpop.f32.mrb[0].mxu0
        %1007 = vdwg.mxu0
        %1008 = vmatprep.subr.bf16.mxu0 0
        %1009 = vmatpush1.bf16.msra.mxu0 %v788
        %1010 = vmatprep.subr.bf16.mxu0 0
        %1011 = vmatpush1.bf16.msra.mxu0 %v789
        %1012 = vmatprep.subr.bf16.mxu0 0
        %1013 = vmatpush1.bf16.msra.mxu0 %v790
        %1014 = vmatprep.subr.bf16.mxu0 0
        %1015 = vmatpush1.bf16.msra.mxu0 %v791
        %1016 = vmatprep.subr.bf16.mxu0 0
        %1017 = vmatpush1.bf16.msra.mxu0 %v792
        %1018 = vmatprep.subr.bf16.mxu0 0
        %1019 = vmatpush1.bf16.msra.mxu0 %v859
        %1020 = vmatprep.subr.bf16.mxu0 0
        %1021 = vmatpush1.bf16.msra.mxu0 0
        %1022 = vmatprep.subr.bf16.mxu0 0
        %1023 = vmatpush1.bf16.msra.mxu0 0
        %1024 = vmatprep.subr.bf16.mxu0 0
        %1025 = vmatpush1.bf16.msra.mxu0 0
        %1026 = vmatprep.subr.bf16.mxu0 0
        %1027 = vmatpush1.bf16.msra.mxu0 0
        %1028 = vmatprep.subr.bf16.mxu0 0
        %1029 = vmatpush1.bf16.msra.mxu0 0
        %1030 = vmatprep.subr.bf16.mxu0 0
        %1031 = vmatpush1.bf16.msra.mxu0 0
        %1032 = vmatprep.subr.bf16.mxu0 0
        %1033 = vmatpush1.bf16.msra.mxu0 0
        %1034 = vmatprep.subr.bf16.mxu0 0
        %1035 = vmatpush1.bf16.msra.mxu0 0
        %1036 = vmatprep.subr.bf16.mxu0 0
        %1037 = vmatpush1.bf16.msra.mxu0 0
        %1038 = vmatprep.subr.bf16.mxu0 0
        %1039 = vmatpush1.bf16.msra.mxu0 0
        %1040 = vmatprep.mubr.bf16.mxu0 0
        %1041 = vmatmul.mubr.bf16.gmra.mrb[0].mxu0 %v849
        %v1042 = vpop.f32.mrb[0].mxu0
        %v1043 = vadd.f32 %v994, %v1042
        %v1044 = vpop.f32.mrb[0].mxu0
        %v1045 = vpop.f32.mrb[0].mxu0
        %v1046 = vadd.f32 %v997, %v1045
        %v1047 = vpop.f32.mrb[0].mxu0
        %1048 = vmatprep.mubr.bf16.mxu0 0
        %1049 = vmatmul.mubr.bf16.gmra.mrb[0].mxu0 %v852
        %v1050 = vpop.f32.mrb[0].mxu0
        %v1051 = vadd.f32 %v1002, %v1050
        %v1052 = vpop.f32.mrb[0].mxu0
        %v1053 = vpop.f32.mrb[0].mxu0
        %v1054 = vadd.f32 %v1005, %v1053
        %v1055 = vpop.f32.mrb[0].mxu0
        %1056 = vdwg.mxu0
        %v1057 = vmax.f32 %v1043, 0.0
        %v1058 = vmax.f32 %v1046, 0.0
        %v1059 = vmax.f32 %v1051, 0.0
        %v1060 = vmax.f32 %v1054, 0.0
        %v1061 = vpack.c.bf16 %v1058, %v1057
        %v1062 = vpack.c.bf16 %v1060, %v1059
        %v1063 = vld [vmem:[%s3] sm:$0xf]
        %v1064 = vld [vmem:[%s3 + $0x4] sm:$0xf]
        %v1065 = vld [vmem:[%s3 + $0x8] sm:$0xf]
        %v1066 = vld [vmem:[%s3 + $0xc] sm:$0xf]
        %v1067 = vld [vmem:[%s3 + $0x10] sm:$0xf]
        %v1068 = vld [vmem:[%s3 + $0x14] sm:$0xf]
        %v1069 = vld [vmem:[%s3 + $0x18] sm:$0xf]
        %v1070 = vld [vmem:[%s3 + $0x1c] sm:$0xf]
        %v1071 = vld [vmem:[%s3 + $0x20] sm:$0xf]
        %v1072 = vld [vmem:[%s3 + $0x24] sm:$0xf]
        %v1073 = vld [vmem:[%s3 + $0x28] sm:$0xf]
        %v1074 = vld [vmem:[%s3 + $0x2c] sm:$0xf]
        %v1075 = vld [vmem:[%s3 + $0x30] sm:$0xf]
        %v1076 = vld [vmem:[%s3 + $0x34] sm:$0xf]
        %v1077 = vld [vmem:[%s3 + $0x38] sm:$0xf]
        %v1078 = vld [vmem:[%s3 + $0x3c] sm:$0xf]
        %v1079 = vld [vmem:[%s4] sm:$0x1]
        %v1081 = vlaneseq
        %v1082 = vshrl.u32 %v1081, 7
        %v1083 = vsub.s32 0, %v1082
        %v1084 = vrot.slane %v1079, %v1083
        %v1102 = vunpack.c.l.b16 %v1063
        %v1103 = vunpack.c.l.b16 %v1064
        %v1104 = vunpack.c.l.b16 %v1065
        %v1105 = vunpack.c.l.b16 %v1066
        %v1106 = vunpack.c.l.b16 %v1067
        %v1107 = vunpack.c.l.b16 %v1068
        %v1108 = vunpack.c.l.b16 %v1069
        %v1109 = vunpack.c.l.b16 %v1070
        %v1110 = vunpack.c.l.b16 %v1071
        %v1111 = vunpack.c.l.b16 %v1072
        %v1112 = vunpack.c.l.b16 %v1073
        %v1113 = vunpack.c.l.b16 %v1074
        %v1114 = vunpack.c.l.b16 %v1075
        %v1115 = vunpack.c.l.b16 %v1076
        %v1116 = vunpack.c.l.b16 %v1077
        %v1117 = vunpack.c.l.b16 %v1078
        %v1118 = vpack.c.b16 %v1103, %v1102
        %v1119 = vpack.c.b16 %v1105, %v1104
        %v1120 = vpack.c.b16 %v1107, %v1106
        %v1121 = vpack.c.b16 %v1109, %v1108
        %v1122 = vpack.c.b16 %v1111, %v1110
        %v1123 = vpack.c.b16 %v1113, %v1112
        %v1124 = vpack.c.b16 %v1115, %v1114
        %v1125 = vpack.c.b16 %v1117, %v1116
        %1134 = vmatprep.subr.bf16.mxu0 0
        %1135 = vmatpush1.bf16.msra.mxu0 %v1118
        %1136 = vmatprep.subr.bf16.mxu0 0
        %1137 = vmatpush1.bf16.msra.mxu0 %v1119
        %1138 = vmatprep.subr.bf16.mxu0 0
        %1139 = vmatpush1.bf16.msra.mxu0 %v1120
        %1140 = vmatprep.subr.bf16.mxu0 0
        %1141 = vmatpush1.bf16.msra.mxu0 %v1121
        %1142 = vmatprep.subr.bf16.mxu0 0
        %1143 = vmatpush1.bf16.msra.mxu0 %v1122
        %1144 = vmatprep.subr.bf16.mxu0 0
        %1145 = vmatpush1.bf16.msra.mxu0 %v1123
        %1146 = vmatprep.subr.bf16.mxu0 0
        %1147 = vmatpush1.bf16.msra.mxu0 %v1124
        %1148 = vmatprep.subr.bf16.mxu0 0
        %1149 = vmatpush1.bf16.msra.mxu0 %v1125
        %1150 = vmatprep.subr.bf16.mxu0 0
        %1151 = vmatpush1.bf16.msra.mxu0 0
        %1152 = vmatprep.subr.bf16.mxu0 0
        %1153 = vmatpush1.bf16.msra.mxu0 0
        %1154 = vmatprep.subr.bf16.mxu0 0
        %1155 = vmatpush1.bf16.msra.mxu0 0
        %1156 = vmatprep.subr.bf16.mxu0 0
        %1157 = vmatpush1.bf16.msra.mxu0 0
        %1158 = vmatprep.subr.bf16.mxu0 0
        %1159 = vmatpush1.bf16.msra.mxu0 0
        %1160 = vmatprep.subr.bf16.mxu0 0
        %1161 = vmatpush1.bf16.msra.mxu0 0
        %1162 = vmatprep.subr.bf16.mxu0 0
        %1163 = vmatpush1.bf16.msra.mxu0 0
        %1164 = vmatprep.subr.bf16.mxu0 0
        %1165 = vmatpush1.bf16.msra.mxu0 0
        %1166 = vmatprep.mubr.bf16.mxu0 0
        %1167 = vmatmul.mubr.bf16.gmra.mrb[0].mxu0 %v1061
        %v1168 = vpop.f32.mrb[0].mxu0
        %v1169 = vadd.f32 %v1084, %v1168
        %v1170 = vpop.f32.mrb[0].mxu0
        %v1171 = vpop.f32.mrb[0].mxu0
        %v1172 = vadd.f32 %v1084, %v1171
        %v1173 = vpop.f32.mrb[0].mxu0
        %1174 = vmatprep.mubr.bf16.mxu0 0
        %1175 = vmatmul.mubr.bf16.gmra.mrb[0].mxu0 %v1062
        %v1176 = vpop.f32.mrb[0].mxu0
        %v1177 = vadd.f32 %v1084, %v1176
        %v1178 = vpop.f32.mrb[0].mxu0
        %v1179 = vpop.f32.mrb[0].mxu0
        %v1180 = vadd.f32 %v1084, %v1179
        %v1181 = vpop.f32.mrb[0].mxu0
        %1182 = vdwg.mxu0
        %v1183 = vmax.f32 %v1169, 0.0
        %v1184 = vmax.f32 %v1172, 0.0
        %v1185 = vmax.f32 %v1177, 0.0
        %v1186 = vmax.f32 %v1180, 0.0
        %v1187 = vpack.c.bf16 %v1184, %v1183
        %v1188 = vpack.c.bf16 %v1186, %v1185
        %v1189 = vld [vmem:[%s5] sm:$0xf]
        %v1190 = vld [vmem:[%s5 + $0x4] sm:$0xf]
        %v1191 = vld [vmem:[%s5 + $0x8] sm:$0xf]
        %v1192 = vld [vmem:[%s5 + $0xc] sm:$0xf]
        %v1193 = vld [vmem:[%s5 + $0x10] sm:$0xf]
        %v1194 = vld [vmem:[%s5 + $0x14] sm:$0xf]
        %v1195 = vld [vmem:[%s5 + $0x18] sm:$0xf]
        %v1196 = vld [vmem:[%s5 + $0x1c] sm:$0xf]
        %v1197 = vld [vmem:[%s6] sm:$0x1]
        %v1199 = vlaneseq
        %v1200 = vshrl.u32 %v1199, 7
        %v1201 = vsub.s32 0, %v1200
        %v1202 = vrot.slane %v1197, %v1201
        %v1212 = vunpack.c.l.b16 %v1189
        %v1213 = vunpack.c.l.b16 %v1190
        %v1214 = vunpack.c.l.b16 %v1191
        %v1215 = vunpack.c.l.b16 %v1192
        %v1216 = vunpack.c.l.b16 %v1193
        %v1217 = vunpack.c.l.b16 %v1194
        %v1218 = vunpack.c.l.b16 %v1195
        %v1219 = vunpack.c.l.b16 %v1196
        %v1220 = vpack.c.b16 %v1213, %v1212
        %v1221 = vpack.c.b16 %v1215, %v1214
        %v1222 = vpack.c.b16 %v1217, %v1216
        %v1223 = vpack.c.b16 %v1219, %v1218
        %vm1228 = vcmask 523264
        %v1230 = vsel %vm1228, %v1187, 0
        %v1233 = vsel %vm1228, %v1188, 0
        %1235 = vmatprep.subr.bf16.mxu0 0
        %1236 = vmatpush1.bf16.msra.mxu0 %v1220
        %1237 = vmatprep.subr.bf16.mxu0 0
        %1238 = vmatpush1.bf16.msra.mxu0 %v1221
        %1239 = vmatprep.subr.bf16.mxu0 0
        %1240 = vmatpush1.bf16.msra.mxu0 %v1222
        %1241 = vmatprep.subr.bf16.mxu0 0
        %1242 = vmatpush1.bf16.msra.mxu0 %v1223
        %1243 = vmatprep.subr.bf16.mxu0 0
        %1244 = vmatpush1.bf16.msra.mxu0 0
        %1245 = vmatprep.subr.bf16.mxu0 0
        %1246 = vmatpush1.bf16.msra.mxu0 0
        %1247 = vmatprep.subr.bf16.mxu0 0
        %1248 = vmatpush1.bf16.msra.mxu0 0
        %1249 = vmatprep.subr.bf16.mxu0 0
        %1250 = vmatpush1.bf16.msra.mxu0 0
        %1251 = vmatprep.subr.bf16.mxu0 0
        %1252 = vmatpush1.bf16.msra.mxu0 0
        %1253 = vmatprep.subr.bf16.mxu0 0
        %1254 = vmatpush1.bf16.msra.mxu0 0
        %1255 = vmatprep.subr.bf16.mxu0 0
        %1256 = vmatpush1.bf16.msra.mxu0 0
        %1257 = vmatprep.subr.bf16.mxu0 0
        %1258 = vmatpush1.bf16.msra.mxu0 0
        %1259 = vmatprep.subr.bf16.mxu0 0
        %1260 = vmatpush1.bf16.msra.mxu0 0
        %1261 = vmatprep.subr.bf16.mxu0 0
        %1262 = vmatpush1.bf16.msra.mxu0 0
        %1263 = vmatprep.subr.bf16.mxu0 0
        %1264 = vmatpush1.bf16.msra.mxu0 0
        %1265 = vmatprep.subr.bf16.mxu0 0
        %1266 = vmatpush1.bf16.msra.mxu0 0
        %1267 = vmatprep.mubr.bf16.mxu0 0
        %1268 = vmatmul.mubr.bf16.gmra.mrb[0].mxu0 %v1230
        %v1269 = vpop.f32.mrb[0].mxu0
        %v1270 = vadd.f32 %v1202, %v1269
        %v1271 = vpop.f32.mrb[0].mxu0
        %v1272 = vpop.f32.mrb[0].mxu0
        %v1273 = vadd.f32 %v1202, %v1272
        %v1274 = vpop.f32.mrb[0].mxu0
        %1275 = vmatprep.mubr.bf16.mxu0 0
        %1276 = vmatmul.mubr.bf16.gmra.mrb[0].mxu0 %v1233
        %v1277 = vpop.f32.mrb[0].mxu0
        %v1278 = vadd.f32 %v1202, %v1277
        %v1279 = vpop.f32.mrb[0].mxu0
        %v1280 = vpop.f32.mrb[0].mxu0
        %v1281 = vadd.f32 %v1202, %v1280
        %v1282 = vpop.f32.mrb[0].mxu0
        %1283 = vdwg.mxu0
        %v1284 = vmax.f32 %v1270, 0.0
        %v1285 = vmax.f32 %v1273, 0.0
        %v1286 = vmax.f32 %v1278, 0.0
        %v1287 = vmax.f32 %v1281, 0.0
        %v1288 = vld [vmem:[%s7] sm:$0x1]
        %v1289 = vld [vmem:[#allocation2] sm:$0x1]
        %1291 = vset.pattern.permute.xlu0 0
        %1292 = vperm.xlu0 %1291, %v1289
        %v1293 = vpop.permute.xlu0 %1292
        %v1295 = vlaneseq
        %v1296 = vshrl.u32 %v1295, 7
        %v1297 = vsub.s32 0, %v1296
        %v1298 = vrot.slane %v1293, %v1297
        %vm1299 = vcmask 261120
        %v1301 = vsel %vm1299, %v1288, 0
        %v1304 = vsel %vm1299, %v1284, 0
        %v1307 = vsel %vm1299, %v1285, 0
        %v1310 = vsel %vm1299, %v1286, 0
        %v1313 = vsel %vm1299, %v1287, 0
        %1315 = vmatprep.subr.mxu0 0.0
        %1316 = vmatpush1.xpose.msra.mxu0 %v1304
        %1317 = vmatprep.subr.mxu0 0.0
        %1318 = vmatpush1.xpose.msra.mxu0 %v1307
        %1319 = vmatprep.subr.mxu0 0.0
        %1320 = vmatpush1.xpose.msra.mxu0 %v1310
        %1321 = vmatprep.subr.mxu0 0.0
        %1322 = vmatpush1.xpose.msra.mxu0 %v1313
        %1323 = vmatprep.subr.mxu0 0.0
        %1324 = vmatpush1.xpose.msra.mxu0 0.0
        %1325 = vmatprep.subr.mxu0 0.0
        %1326 = vmatpush1.xpose.msra.mxu0 0.0
        %1327 = vmatprep.subr.mxu0 0.0
        %1328 = vmatpush1.xpose.msra.mxu0 0.0
        %1329 = vmatprep.subr.mxu0 0.0
        %1330 = vmatpush1.xpose.msra.mxu0 0.0
        %1331 = vmatprep.subr.mxu0 0.0
        %1332 = vmatpush1.xpose.msra.mxu0 0.0
        %1333 = vmatprep.subr.mxu0 0.0
        %1334 = vmatpush1.xpose.msra.mxu0 0.0
        %1335 = vmatprep.subr.mxu0 0.0
        %1336 = vmatpush1.xpose.msra.mxu0 0.0
        %1337 = vmatprep.subr.mxu0 0.0
        %1338 = vmatpush1.xpose.msra.mxu0 0.0
        %1339 = vmatprep.subr.mxu0 0.0
        %1340 = vmatpush1.xpose.msra.mxu0 0.0
        %1341 = vmatprep.subr.mxu0 0.0
        %1342 = vmatpush1.xpose.msra.mxu0 0.0
        %1343 = vmatprep.subr.mxu0 0.0
        %1344 = vmatpush1.xpose.msra.mxu0 0.0
        %1345 = vmatprep.subr.mxu0 0.0
        %1346 = vmatpush1.xpose.msra.mxu0 0.0
        %1347 = vmatprep.subr.mxu0 0.0
        %1348 = vmatpush1.xpose.msra.mxu0 0.0
        %1349 = vmatprep.subr.mxu0 0.0
        %1350 = vmatpush1.xpose.msra.mxu0 0.0
        %1351 = vmatprep.subr.mxu0 0.0
        %1352 = vmatpush1.xpose.msra.mxu0 0.0
        %1353 = vmatprep.subr.mxu0 0.0
        %1354 = vmatpush1.xpose.msra.mxu0 0.0
        %1355 = vmatprep.subr.mxu0 0.0
        %1356 = vmatpush1.xpose.msra.mxu0 0.0
        %1357 = vmatprep.subr.mxu0 0.0
        %1358 = vmatpush1.xpose.msra.mxu0 0.0
        %1359 = vmatprep.subr.mxu0 0.0
        %1360 = vmatpush1.xpose.msra.mxu0 0.0
        %1361 = vmatprep.subr.mxu0 0.0
        %1362 = vmatpush1.xpose.msra.mxu0 0.0
        %1363 = vmatprep.subr.mxu0 0.0
        %1364 = vmatpush1.xpose.msra.mxu0 0.0
        %1365 = vmatprep.subr.mxu0 0.0
        %1366 = vmatpush1.xpose.msra.mxu0 0.0
        %1367 = vmatprep.subr.mxu0 0.0
        %1368 = vmatpush1.xpose.msra.mxu0 0.0
        %1369 = vmatprep.subr.mxu0 0.0
        %1370 = vmatpush1.xpose.msra.mxu0 0.0
        %1371 = vmatprep.subr.mxu0 0.0
        %1372 = vmatpush1.xpose.msra.mxu0 0.0
        %1373 = vmatprep.subr.mxu0 0.0
        %1374 = vmatpush1.xpose.msra.mxu0 0.0
        %1375 = vmatprep.subr.mxu0 0.0
        %1376 = vmatpush1.xpose.msra.mxu0 0.0
        %1377 = vmatprep.subr.mxu0 0.0
        %1378 = vmatpush1.xpose.msra.mxu0 0.0
        %1379 = vmatprep.mubr.f32.mxu0 0.0
        %1380 = vmatmul.mubr.f32.gmra.mrb[0].mxu0 %v1301
        %v1381 = vpop.f32.mrb[0].mxu0
        %v1382 = vadd.f32 %v1298, %v1381
        %v1383 = vpop.f32.mrb[0].mxu0
        %1384 = vdwg.mxu0
        %v1385 = vxor.u32 %v1382, 2147483648
        %v1386 = vmul.f32 %v1385, 1.442695
        %v1387 = vpow.pop %v1386
        %v1388 = vadd.f32 %v1387, 1.0
        %v1389 = vrcp.pop %v1388
        %v1390 = vmul.f32 1.0, %v1389
        %vm1391 = vcmask 253952
        %1392 = vst.msk [vmem:[%s367] sm:$0x1] %vm1391, %v1390
        %s1393 = sand.u32 %s231, 1
        %s1394 = scalar_lea.sflag [#allocation5], %s1393
        %s1395 = sand.u32 %s231, 1
        %s1396 = scalar_lea.vmem [#allocation8], %s1395
        // Predicated region
        $region65: #{tpu_custom_call.1} parent=55 // pred_check
          %p1397 = pneg %p241
        $region66: #{tpu_custom_call.1} parent=55 // pred_check_branch
          %1399 = sbr.rel (%p1397) target = $region68
        $region67: #{tpu_custom_call.1} parent=55 // pred_region
          %s1401 = ssub.s32 16, 16
          %1402 = vsyncadd %s1394, %s1401
          %s1403 = smul.addr %s29, 16
          %s1404 = scalar_lea.hbm %s9, %s1403
          %s1406 = sshll.u32 %s1396, 4
          %s1407 = int_to_ptr.vmem [resolvable:$true] %s1406
          %1409 = dma.vmem_to_hbm [thread:$0]  %s1407, 16, %s1404, %s1394
        $region68: #{tpu_custom_call.1} parent=55 // pred_fallthru
          _
      $region56: #{tpu_custom_call.1} parent=5 // pred_fallthru
        _
      %p1410 = scmp.le.s32.totalorder 2, %s24
      // Predicated region
      $region69: #{tpu_custom_call.1} parent=5 // pred_check
        %p1411 = pneg %p1410
      $region70: #{tpu_custom_call.1} parent=5 // pred_check_branch
        %1413 = sbr.rel (%p1411) target = $region72
      $region71: #{tpu_custom_call.1} parent=5 // pred_region
        %s1414 = ssub.s32 %s24, 2
        // Predicated region
        $region73: #{tpu_custom_call.1} parent=71 // pred_check
          %p1415 = pneg %p247
        $region74: #{tpu_custom_call.1} parent=71 // pred_check_branch
          %1417 = sbr.rel (%p1415) target = $region76
        $region75: #{tpu_custom_call.1} parent=71 // pred_region
          %s1418 = sand.u32 %s232, 1
          %s1419 = scalar_lea.sflag [#allocation5], %s1418
          %s1420 = sand.u32 %s232, 1
          %s1421 = scalar_lea.vmem [#allocation8], %s1420
          %1422 = dma.done %s1419, 16
        $region76: #{tpu_custom_call.1} parent=71 // pred_fallthru
          _
      $region72: #{tpu_custom_call.1} parent=5 // pred_fallthru
        _
    $region6: #{tpu_custom_call.1} parent=1 // loop_footer
      %s28 = sadd.s32 1, %s24
    $region7: #{tpu_custom_call.1} parent=1 // loop_footer_branch
      %23 = sbr.rel target = $region3
    $region8: #{tpu_custom_call.1} parent=1 // loop_exit
      _
    %1423 = vsyncpa [#allocation4], 1
    %s1424 = scalar_lea.sflag [#allocation4], 1
    %1425 = vsyncpa %s1424, 1
    %1426 = vsyncpa [#allocation7], 1
    %1427 = vsyncpa [#allocation5], 1
    %s1428 = scalar_lea.sflag [#allocation5], 1
    %1429 = vsyncpa %s1428, 1

</llo_original>
